<compile_context>
chip_gen: v7x
topology: tpu7x:2x2x1
jax: 0.10.0
libtpu: 0.0.40
codegen_flags: <defaults>
</compile_context>

<pallas_src>
import jax
import jax.numpy as jnp
from jax.experimental import pallas as pl
from jax.experimental.pallas import tpu as pltpu


def _make_hpf_kernel(K: int, H: int, W: int, TB: int):
    p = K // 2
    Hp, Wp = H + 2 * p, W + 2 * p

    def hpf_kernel(w_ref, x_ref, o_ref, xs_ref):
        # w_ref : (K,)        1-D gaussian taps (SMEM scalar reads)
        # x_ref : (TB, H, W)  input planes (VMEM)
        # o_ref : (TB, H, W)  output = blur(img) - img
        # xs_ref: (TB, Hp, Wp) VMEM scratch: reflect-padded planes
        x = x_ref[...]  # (TB, H, W) f32 — reused for padding AND the final subtract

        # ---- reflect padding fused into the kernel (no padded HBM copy) ----
        xs_ref[:, p:p + H, p:p + W] = x
        for r in range(p):  # top / bottom halo rows (reflect, no edge repeat)
            xs_ref[:, r:r + 1, p:p + W] = x[:, p - r:p - r + 1, :]
            xs_ref[:, H + p + r:H + p + r + 1, p:p + W] = x[:, H - 2 - r:H - 1 - r, :]
        for c in range(p):  # left / right halo columns (reads include corners)
            lsrc = 2 * p - c
            col = xs_ref[:, :, lsrc:lsrc + 1]
            xs_ref[:, :, c:c + 1] = col
            rsrc = W + p - 2 - c
            rdst = W + p + c
            col = xs_ref[:, :, rsrc:rsrc + 1]
            xs_ref[:, :, rdst:rdst + 1] = col

        # ---- separable gaussian: vertical (sublane shifts) then horizontal ----
        tmp = w_ref[0] * xs_ref[:, 0:H, :]
        for i in range(1, K):                       # K taps instead of K*K
            tmp = tmp + w_ref[i] * xs_ref[:, i:i + H, :]          # (TB, H, Wp)
        acc = w_ref[0] * tmp[:, :, 0:W]
        for j in range(1, K):
            acc = acc + w_ref[j] * tmp[:, :, j:j + W]             # (TB, H, W)

        # high-pass: blur - img (input already in registers, no extra load)
        o_ref[...] = (acc - x).astype(o_ref.dtype)

    return hpf_kernel


def _gaussian_kernel1d(kernel_size: int, sigma):
    # mirrors torchvision _get_gaussian_kernel1d
    half = (kernel_size - 1) * 0.5
    x = jnp.linspace(-half, half, kernel_size, dtype=jnp.float32)
    pdf = jnp.exp(-0.5 * jnp.square(x / sigma))
    return pdf / jnp.sum(pdf)


def hpf_forward(img, log_sigma, kernel_size: int):
    """img: (N, C, H, W) float32. Returns gaussian_blur(img) - img, NCHW."""
    N, C, H, W = img.shape
    K = kernel_size
    p = K // 2
    assert p < H and p < W, "reflect padding requires kernel_size//2 < H and < W"

    sigma = jnp.exp(log_sigma)[0]
    w1d = _gaussian_kernel1d(K, sigma).astype(jnp.float32)  # same kernel for x & y

    B = N * C
    x = img.reshape(B, H, W).astype(jnp.float32)

    Hp, Wp = H + 2 * p, W + 2 * p

    # Batch as many planes per grid step as fits a modest VMEM budget
    # (double-buffered in/out + padded scratch stay well under default scoped VMEM).
    plane_bytes = Hp * Wp * 4
    tb_cap = max(1, (2 * 1024 * 1024) // plane_bytes)
    TB = 1
    for d in range(1, B + 1):
        if B % d == 0 and d <= tb_cap:
            TB = d
    # TODO(synk): strip-tile H (with halo rows) for planes too large for a single
    # (TB, Hp, Wp) VMEM block (e.g. >2k x 2k f32 on v7x's 64 MiB VMEM).

    kernel_fn = _make_hpf_kernel(K, H, W, TB)

    cost = pl.CostEstimate(
        flops=int((4 * K + 1) * B * H * W),          # separable MACs + subtract
        transcendentals=0,
        bytes_accessed=int(8 * B * H * W + 4 * K),   # read + write f32 planes
    )

    out = pl.pallas_call(
        kernel_fn,
        out_shape=jax.ShapeDtypeStruct((B, H, W), jnp.float32),
        grid=(B // TB,),
        in_specs=[
            pl.BlockSpec(memory_space=pltpu.MemorySpace.SMEM),      # (K,) weights
            pl.BlockSpec((TB, H, W), lambda b: (b, 0, 0)),          # input planes
        ],
        out_specs=pl.BlockSpec((TB, H, W), lambda b: (b, 0, 0)),
        scratch_shapes=[pltpu.VMEM((TB, Hp, Wp), jnp.float32)],     # padded planes
        compiler_params=pltpu.CompilerParams(
            dimension_semantics=("parallel",),
        ),
        cost_estimate=cost,
    )(w1d, x)

    return out.reshape(N, C, H, W)


def _reference(img, log_sigma, kernel_size):
    # pure-JAX reference: direct K*K depthwise conv over a reflect-padded copy
    N, C, H, W = img.shape
    K = kernel_size
    p = K // 2
    sigma = jnp.exp(log_sigma)[0]
    k1d = _gaussian_kernel1d(K, sigma)
    w = jnp.outer(k1d, k1d)
    x = img.reshape(N * C, H, W)
    xpad = jnp.pad(x, ((0, 0), (p, p), (p, p)), mode="reflect")
    acc = jnp.zeros_like(x)
    for i in range(K):
        for j in range(K):
            acc = acc + w[i, j] * xpad[:, i:i + H, j:j + W]
    return (acc - x).reshape(N, C, H, W)


if __name__ == "__main__":
    kernel_size = 5
    key = jax.random.PRNGKey(0)
    k_img, k_sigma = jax.random.split(key)

    img = jax.random.normal(k_img, (2, 4, 16, 16), dtype=jnp.float32)
    log_sigma = jax.random.normal(k_sigma, (1,), dtype=jnp.float32)  # nn.Parameter(torch.randn(1))

    out = hpf_forward(img, log_sigma, kernel_size)
    out = jax.block_until_ready(out)

    ref = _reference(img, log_sigma, kernel_size)
    assert out.shape == (2, 4, 16, 16)
    assert jnp.allclose(out, ref, atol=1e-5, rtol=1e-5)

    print("KERNEL_OK")
</pallas_src>

<mosaic_0001>
module attributes {stable_mosaic.version = 11 : i64} {
  func.func @hpf_kernel(%arg0: i32, %arg1: memref<5xf32, #tpu.memory_space<smem>>, %arg2: memref<8x16x16xf32, #tpu.memory_space<vmem>>, %arg3: memref<8x16x16xf32, #tpu.memory_space<vmem>>, %arg4: memref<8x20x20xf32, #tpu.memory_space<vmem>>) attributes {dimension_semantics = [#tpu.dimension_semantics<parallel>], iteration_bounds = array<i64: 1>, scalar_prefetch = 0 : i64, scratch_operands = 1 : i64, tpu.core_type = #tpu.core_type<tc>, window_params = [{transform_indices = @transform_0, window_bounds = array<i64: 5>}, {transform_indices = @transform_1, window_bounds = array<i64: 8, 16, 16>}, {transform_indices = @transform_2, window_bounds = array<i64: 8, 16, 16>}]} {
    %c0 = arith.constant 0 : index
    %c0_0 = arith.constant 0 : index
    %c0_1 = arith.constant 0 : index
    %0 = vector.load %arg2[%c0, %c0_0, %c0_1] : memref<8x16x16xf32, #tpu.memory_space<vmem>>, vector<8x16x16xf32>
    %c0_2 = arith.constant 0 : index
    %c2 = arith.constant 2 : index
    %c2_3 = arith.constant 2 : index
    %1 = vector.load %arg4[%c0_2, %c2, %c2_3] : memref<8x20x20xf32, #tpu.memory_space<vmem>>, vector<8x16x16xf32>
    tpu.vector_store %arg4[%c0_2, %c2, %c2_3], %0 {strides = array<i32>} : memref<8x20x20xf32, #tpu.memory_space<vmem>>, vector<8x16x16xf32>,
    %2 = vector.extract_strided_slice %0 {offsets = [0, 2, 0], sizes = [8, 1, 16], strides = [1, 1, 1]} : vector<8x16x16xf32> to vector<8x1x16xf32>
    %c0_4 = arith.constant 0 : index
    %c0_5 = arith.constant 0 : index
    %c2_6 = arith.constant 2 : index
    %3 = vector.load %arg4[%c0_4, %c0_5, %c2_6] : memref<8x20x20xf32, #tpu.memory_space<vmem>>, vector<8x1x16xf32>
    tpu.vector_store %arg4[%c0_4, %c0_5, %c2_6], %2 {strides = array<i32>} : memref<8x20x20xf32, #tpu.memory_space<vmem>>, vector<8x1x16xf32>,
    %4 = vector.extract_strided_slice %0 {offsets = [0, 14, 0], sizes = [8, 1, 16], strides = [1, 1, 1]} : vector<8x16x16xf32> to vector<8x1x16xf32>
    %c0_7 = arith.constant 0 : index
    %c18 = arith.constant 18 : index
    %c2_8 = arith.constant 2 : index
    %5 = vector.load %arg4[%c0_7, %c18, %c2_8] : memref<8x20x20xf32, #tpu.memory_space<vmem>>, vector<8x1x16xf32>
    tpu.vector_store %arg4[%c0_7, %c18, %c2_8], %4 {strides = array<i32>} : memref<8x20x20xf32, #tpu.memory_space<vmem>>, vector<8x1x16xf32>,
    %6 = vector.extract_strided_slice %0 {offsets = [0, 1, 0], sizes = [8, 1, 16], strides = [1, 1, 1]} : vector<8x16x16xf32> to vector<8x1x16xf32>
    %c0_9 = arith.constant 0 : index
    %c1 = arith.constant 1 : index
    %c2_10 = arith.constant 2 : index
    %7 = vector.load %arg4[%c0_9, %c1, %c2_10] : memref<8x20x20xf32, #tpu.memory_space<vmem>>, vector<8x1x16xf32>
    tpu.vector_store %arg4[%c0_9, %c1, %c2_10], %6 {strides = array<i32>} : memref<8x20x20xf32, #tpu.memory_space<vmem>>, vector<8x1x16xf32>,
    %8 = vector.extract_strided_slice %0 {offsets = [0, 13, 0], sizes = [8, 1, 16], strides = [1, 1, 1]} : vector<8x16x16xf32> to vector<8x1x16xf32>
    %c0_11 = arith.constant 0 : index
    %c19 = arith.constant 19 : index
    %c2_12 = arith.constant 2 : index
    %9 = vector.load %arg4[%c0_11, %c19, %c2_12] : memref<8x20x20xf32, #tpu.memory_space<vmem>>, vector<8x1x16xf32>
    tpu.vector_store %arg4[%c0_11, %c19, %c2_12], %8 {strides = array<i32>} : memref<8x20x20xf32, #tpu.memory_space<vmem>>, vector<8x1x16xf32>,
    %c0_13 = arith.constant 0 : index
    %c0_14 = arith.constant 0 : index
    %c4 = arith.constant 4 : index
    %10 = vector.load %arg4[%c0_13, %c0_14, %c4] : memref<8x20x20xf32, #tpu.memory_space<vmem>>, vector<8x20x1xf32>
    %c0_15 = arith.constant 0 : index
    %c0_16 = arith.constant 0 : index
    %c0_17 = arith.constant 0 : index
    %11 = vector.load %arg4[%c0_15, %c0_16, %c0_17] : memref<8x20x20xf32, #tpu.memory_space<vmem>>, vector<8x20x1xf32>
    tpu.vector_store %arg4[%c0_15, %c0_16, %c0_17], %10 {strides = array<i32>} : memref<8x20x20xf32, #tpu.memory_space<vmem>>, vector<8x20x1xf32>,
    %c0_18 = arith.constant 0 : index
    %c0_19 = arith.constant 0 : index
    %c16 = arith.constant 16 : index
    %12 = vector.load %arg4[%c0_18, %c0_19, %c16] : memref<8x20x20xf32, #tpu.memory_space<vmem>>, vector<8x20x1xf32>
    %c0_20 = arith.constant 0 : index
    %c0_21 = arith.constant 0 : index
    %c18_22 = arith.constant 18 : index
    %13 = vector.load %arg4[%c0_20, %c0_21, %c18_22] : memref<8x20x20xf32, #tpu.memory_space<vmem>>, vector<8x20x1xf32>
    tpu.vector_store %arg4[%c0_20, %c0_21, %c18_22], %12 {strides = array<i32>} : memref<8x20x20xf32, #tpu.memory_space<vmem>>, vector<8x20x1xf32>,
    %c0_23 = arith.constant 0 : index
    %c0_24 = arith.constant 0 : index
    %c3 = arith.constant 3 : index
    %14 = vector.load %arg4[%c0_23, %c0_24, %c3] : memref<8x20x20xf32, #tpu.memory_space<vmem>>, vector<8x20x1xf32>
    %c0_25 = arith.constant 0 : index
    %c0_26 = arith.constant 0 : index
    %c1_27 = arith.constant 1 : index
    %15 = vector.load %arg4[%c0_25, %c0_26, %c1_27] : memref<8x20x20xf32, #tpu.memory_space<vmem>>, vector<8x20x1xf32>
    tpu.vector_store %arg4[%c0_25, %c0_26, %c1_27], %14 {strides = array<i32>} : memref<8x20x20xf32, #tpu.memory_space<vmem>>, vector<8x20x1xf32>,
    %c0_28 = arith.constant 0 : index
    %c0_29 = arith.constant 0 : index
    %c15 = arith.constant 15 : index
    %16 = vector.load %arg4[%c0_28, %c0_29, %c15] : memref<8x20x20xf32, #tpu.memory_space<vmem>>, vector<8x20x1xf32>
    %c0_30 = arith.constant 0 : index
    %c0_31 = arith.constant 0 : index
    %c19_32 = arith.constant 19 : index
    %17 = vector.load %arg4[%c0_30, %c0_31, %c19_32] : memref<8x20x20xf32, #tpu.memory_space<vmem>>, vector<8x20x1xf32>
    tpu.vector_store %arg4[%c0_30, %c0_31, %c19_32], %16 {strides = array<i32>} : memref<8x20x20xf32, #tpu.memory_space<vmem>>, vector<8x20x1xf32>,
    %c0_33 = arith.constant 0 : index
    %18 = memref.load %arg1[%c0_33] : memref<5xf32, #tpu.memory_space<smem>>
    %c0_34 = arith.constant 0 : index
    %c0_35 = arith.constant 0 : index
    %c0_36 = arith.constant 0 : index
    %19 = vector.load %arg4[%c0_34, %c0_35, %c0_36] : memref<8x20x20xf32, #tpu.memory_space<vmem>>, vector<8x16x20xf32>
    %20 = vector.broadcast %18 : f32 to vector<8x16x20xf32>
    %21 = arith.mulf %20, %19 : vector<8x16x20xf32>
    %c1_37 = arith.constant 1 : index
    %22 = memref.load %arg1[%c1_37] : memref<5xf32, #tpu.memory_space<smem>>
    %c0_38 = arith.constant 0 : index
    %c1_39 = arith.constant 1 : index
    %c0_40 = arith.constant 0 : index
    %23 = vector.load %arg4[%c0_38, %c1_39, %c0_40] : memref<8x20x20xf32, #tpu.memory_space<vmem>>, vector<8x16x20xf32>
    %24 = vector.broadcast %22 : f32 to vector<8x16x20xf32>
    %25 = arith.mulf %24, %23 : vector<8x16x20xf32>
    %26 = arith.addf %21, %25 : vector<8x16x20xf32>
    %c2_41 = arith.constant 2 : index
    %27 = memref.load %arg1[%c2_41] : memref<5xf32, #tpu.memory_space<smem>>
    %c0_42 = arith.constant 0 : index
    %c2_43 = arith.constant 2 : index
    %c0_44 = arith.constant 0 : index
    %28 = vector.load %arg4[%c0_42, %c2_43, %c0_44] : memref<8x20x20xf32, #tpu.memory_space<vmem>>, vector<8x16x20xf32>
    %29 = vector.broadcast %27 : f32 to vector<8x16x20xf32>
    %30 = arith.mulf %29, %28 : vector<8x16x20xf32>
    %31 = arith.addf %26, %30 : vector<8x16x20xf32>
    %c3_45 = arith.constant 3 : index
    %32 = memref.load %arg1[%c3_45] : memref<5xf32, #tpu.memory_space<smem>>
    %c0_46 = arith.constant 0 : index
    %c3_47 = arith.constant 3 : index
    %c0_48 = arith.constant 0 : index
    %33 = vector.load %arg4[%c0_46, %c3_47, %c0_48] : memref<8x20x20xf32, #tpu.memory_space<vmem>>, vector<8x16x20xf32>
    %34 = vector.broadcast %32 : f32 to vector<8x16x20xf32>
    %35 = arith.mulf %34, %33 : vector<8x16x20xf32>
    %36 = arith.addf %31, %35 : vector<8x16x20xf32>
    %c4_49 = arith.constant 4 : index
    %37 = memref.load %arg1[%c4_49] : memref<5xf32, #tpu.memory_space<smem>>
    %c0_50 = arith.constant 0 : index
    %c4_51 = arith.constant 4 : index
    %c0_52 = arith.constant 0 : index
    %38 = vector.load %arg4[%c0_50, %c4_51, %c0_52] : memref<8x20x20xf32, #tpu.memory_space<vmem>>, vector<8x16x20xf32>
    %39 = vector.broadcast %37 : f32 to vector<8x16x20xf32>
    %40 = arith.mulf %39, %38 : vector<8x16x20xf32>
    %41 = arith.addf %36, %40 : vector<8x16x20xf32>
    %c0_53 = arith.constant 0 : index
    %42 = memref.load %arg1[%c0_53] : memref<5xf32, #tpu.memory_space<smem>>
    %43 = vector.extract_strided_slice %41 {offsets = [0, 0, 0], sizes = [8, 16, 16], strides = [1, 1, 1]} : vector<8x16x20xf32> to vector<8x16x16xf32>
    %44 = vector.broadcast %42 : f32 to vector<8x16x16xf32>
    %45 = arith.mulf %44, %43 : vector<8x16x16xf32>
    %c1_54 = arith.constant 1 : index
    %46 = memref.load %arg1[%c1_54] : memref<5xf32, #tpu.memory_space<smem>>
    %47 = vector.extract_strided_slice %41 {offsets = [0, 0, 1], sizes = [8, 16, 16], strides = [1, 1, 1]} : vector<8x16x20xf32> to vector<8x16x16xf32>
    %48 = vector.broadcast %46 : f32 to vector<8x16x16xf32>
    %49 = arith.mulf %48, %47 : vector<8x16x16xf32>
    %50 = arith.addf %45, %49 : vector<8x16x16xf32>
    %c2_55 = arith.constant 2 : index
    %51 = memref.load %arg1[%c2_55] : memref<5xf32, #tpu.memory_space<smem>>
    %52 = vector.extract_strided_slice %41 {offsets = [0, 0, 2], sizes = [8, 16, 16], strides = [1, 1, 1]} : vector<8x16x20xf32> to vector<8x16x16xf32>
    %53 = vector.broadcast %51 : f32 to vector<8x16x16xf32>
    %54 = arith.mulf %53, %52 : vector<8x16x16xf32>
    %55 = arith.addf %50, %54 : vector<8x16x16xf32>
    %c3_56 = arith.constant 3 : index
    %56 = memref.load %arg1[%c3_56] : memref<5xf32, #tpu.memory_space<smem>>
    %57 = vector.extract_strided_slice %41 {offsets = [0, 0, 3], sizes = [8, 16, 16], strides = [1, 1, 1]} : vector<8x16x20xf32> to vector<8x16x16xf32>
    %58 = vector.broadcast %56 : f32 to vector<8x16x16xf32>
    %59 = arith.mulf %58, %57 : vector<8x16x16xf32>
    %60 = arith.addf %55, %59 : vector<8x16x16xf32>
    %c4_57 = arith.constant 4 : index
    %61 = memref.load %arg1[%c4_57] : memref<5xf32, #tpu.memory_space<smem>>
    %62 = vector.extract_strided_slice %41 {offsets = [0, 0, 4], sizes = [8, 16, 16], strides = [1, 1, 1]} : vector<8x16x20xf32> to vector<8x16x16xf32>
    %63 = vector.broadcast %61 : f32 to vector<8x16x16xf32>
    %64 = arith.mulf %63, %62 : vector<8x16x16xf32>
    %65 = arith.addf %60, %64 : vector<8x16x16xf32>
    %66 = arith.subf %65, %0 : vector<8x16x16xf32>
    %c0_58 = arith.constant 0 : index
    %c0_59 = arith.constant 0 : index
    %c0_60 = arith.constant 0 : index
    %67 = vector.load %arg3[%c0_58, %c0_59, %c0_60] : memref<8x16x16xf32, #tpu.memory_space<vmem>>, vector<8x16x16xf32>
    tpu.vector_store %arg3[%c0_58, %c0_59, %c0_60], %66 {strides = array<i32>} : memref<8x16x16xf32, #tpu.memory_space<vmem>>, vector<8x16x16xf32>,
    return
  }
  func.func @transform_0(%arg0: i32) -> i32 {
    %c0_i32 = arith.constant 0 : i32
    %c0_i32_0 = arith.constant 0 : i32
    return %c0_i32 : i32
  }
  func.func @transform_1(%arg0: i32) -> (i32, i32, i32) {
    %c0_i32 = arith.constant 0 : i32
    %c0_i32_0 = arith.constant 0 : i32
    %c0_i32_1 = arith.constant 0 : i32
    return %arg0, %c0_i32, %c0_i32_0 : i32, i32, i32
  }
  func.func @transform_2(%arg0: i32) -> (i32, i32, i32) {
    %c0_i32 = arith.constant 0 : i32
    %c0_i32_0 = arith.constant 0 : i32
    %c0_i32_1 = arith.constant 0 : i32
    return %arg0, %c0_i32, %c0_i32_0 : i32, i32, i32
  }
}

</mosaic_0001>

<llo_original>
// kernel: tpu_custom_call.1
$region0: #{tpu_custom_call.1}
  #allocation0 [shape = 'u32[]', space=smem, size = 0x4, offset = 0x4, fixed_abs, tag = 'smem constant byte address 0x4 - core index']
  #allocation1 [shape = 'u32[144,128]{1,0:T(1,128)}', space=vmem, size = 0x12000, scoped, tag = 'internal scratch']
  #allocation2 [shape = 'f32[8,20,20]{2,1,0:T(8,128)}', space=vmem, size = 0x18000, scoped, tag = 'scratch operand']
  %s0 = inlined_call_operand.hbm [shape: f32[5], index: 0, kind: input, shape index: {}]
  %s1 = inlined_call_operand.hbm [shape: f32[8,16,16], index: 1, kind: input, shape index: {}]
  %s2 = inlined_call_operand.hbm [shape: f32[8,16,16], index: 2, kind: output, shape index: {}]
  %s3 = sld [smem:[#allocation0]]
  $region26: #{tpu_custom_call.1} parent=0
    _
  %s5 = ssub.s32 1, %s3
  %s6 = scalar_select 0, %s5, %s3
  $region1: #{tpu_custom_call.1} parent=0
    #allocation3 [shape = 'u8[512]{0}', space=smem, size = 0x200, scoped, tag = 'input window, operand 0, single buffered']
    #allocation4 [shape = 's32[1]{0}', space=sflag, size = 0x4, scoped, tag = 'scoped memory for tpu_custom_call.1']
    #allocation5 [shape = 's32[1]{0}', space=sflag, size = 0x4, scoped, tag = 'scoped memory for tpu_custom_call.1']
    #allocation6 [shape = 's32[1]{0}', space=sflag, size = 0x4, scoped, tag = 'scoped memory for tpu_custom_call.1']
    #allocation7 [shape = 'u8[65536]{0}', space=vmem, size = 0x10000, scoped, tag = 'input window, operand 1, single buffered']
    #allocation8 [shape = 'u8[65536]{0}', space=vmem, size = 0x10000, scoped, tag = 'output window, operand 0, single buffered']
    %7 = vsyncpa [#allocation6], 0
    %8 = vsyncpa [#allocation4], 0
    %9 = vsyncpa [#allocation5], 0
    // Predicated region
    $region2: #{tpu_custom_call.1} parent=1 // pred_check
      _
    $region3: #{tpu_custom_call.1} parent=1 // pred_check_branch
      %11 = sbr.rel (0) target = $region5
    $region4: #{tpu_custom_call.1} parent=1 // pred_region
      %s13 = ssub.s32 16, 16
      %14 = vsyncadd [#allocation6], %s13
      %17 = dma.hbm_to_smem %s0, 16, [#allocation3], [#allocation6]
    $region5: #{tpu_custom_call.1} parent=1 // pred_fallthru
      _
    // Predicated region
    $region6: #{tpu_custom_call.1} parent=1 // pred_check
      _
    $region7: #{tpu_custom_call.1} parent=1 // pred_check_branch
      %19 = sbr.rel (0) target = $region9
    $region8: #{tpu_custom_call.1} parent=1 // pred_region
      %s21 = ssub.s32 2048, 2048
      %22 = vsyncadd [#allocation4], %s21
      %s23 = sshll.u32 [#allocation7], 4
      %s24 = int_to_ptr.vmem [resolvable:$true] %s23
      %29 = dma.hbm_to_vmem [thread:$0]  %s1, 2048, %s24, [#allocation4], 128, 128, 8
    $region9: #{tpu_custom_call.1} parent=1 // pred_fallthru
      _
    // Predicated region
    $region10: #{tpu_custom_call.1} parent=1 // pred_check
      _
    $region11: #{tpu_custom_call.1} parent=1 // pred_check_branch
      %31 = sbr.rel (0) target = $region13
    $region12: #{tpu_custom_call.1} parent=1 // pred_region
      %32 = dma.done [#allocation6], 16
    $region13: #{tpu_custom_call.1} parent=1 // pred_fallthru
      _
    // Predicated region
    $region14: #{tpu_custom_call.1} parent=1 // pred_check
      _
    $region15: #{tpu_custom_call.1} parent=1 // pred_check_branch
      %34 = sbr.rel (0) target = $region17
    $region16: #{tpu_custom_call.1} parent=1 // pred_region
      %35 = dma.done [#allocation4], 2048
    $region17: #{tpu_custom_call.1} parent=1 // pred_fallthru
      _
    %36 = sfence
    %v37 = vld [vmem:[#allocation7] sm:$0xff]
    %v38 = vld [vmem:[#allocation7 + $0x8] sm:$0xff]
    %v39 = vld [vmem:[#allocation7 + $0x10] sm:$0xff]
    %v40 = vld [vmem:[#allocation7 + $0x18] sm:$0xff]
    %v41 = vld [vmem:[#allocation7 + $0x20] sm:$0xff]
    %v42 = vld [vmem:[#allocation7 + $0x28] sm:$0xff]
    %v43 = vld [vmem:[#allocation7 + $0x30] sm:$0xff]
    %v44 = vld [vmem:[#allocation7 + $0x38] sm:$0xff]
    %v45 = vld [vmem:[#allocation7 + $0x40] sm:$0xff]
    %v46 = vld [vmem:[#allocation7 + $0x48] sm:$0xff]
    %v47 = vld [vmem:[#allocation7 + $0x50] sm:$0xff]
    %v48 = vld [vmem:[#allocation7 + $0x58] sm:$0xff]
    %v49 = vld [vmem:[#allocation7 + $0x60] sm:$0xff]
    %v50 = vld [vmem:[#allocation7 + $0x68] sm:$0xff]
    %v51 = vld [vmem:[#allocation7 + $0x70] sm:$0xff]
    %v52 = vld [vmem:[#allocation7 + $0x78] sm:$0xff]
    %69 = vrot.lane.b32.xlu0 %v37, 2
    %v70 = vpop.permute.xlu0 %69
    %71 = vrot.lane.b32.xlu0 %v38, 2
    %v72 = vpop.permute.xlu0 %71
    %73 = vrot.lane.b32.xlu0 %v39, 2
    %v74 = vpop.permute.xlu0 %73
    %75 = vrot.lane.b32.xlu0 %v40, 2
    %v76 = vpop.permute.xlu0 %75
    %77 = vrot.lane.b32.xlu0 %v41, 2
    %v78 = vpop.permute.xlu0 %77
    %79 = vrot.lane.b32.xlu0 %v42, 2
    %v80 = vpop.permute.xlu0 %79
    %81 = vrot.lane.b32.xlu0 %v43, 2
    %v82 = vpop.permute.xlu0 %81
    %83 = vrot.lane.b32.xlu0 %v44, 2
    %v84 = vpop.permute.xlu0 %83
    %85 = vrot.lane.b32.xlu0 %v45, 2
    %v86 = vpop.permute.xlu0 %85
    %87 = vrot.lane.b32.xlu0 %v46, 2
    %v88 = vpop.permute.xlu0 %87
    %89 = vrot.lane.b32.xlu0 %v47, 2
    %v90 = vpop.permute.xlu0 %89
    %91 = vrot.lane.b32.xlu0 %v48, 2
    %v92 = vpop.permute.xlu0 %91
    %93 = vrot.lane.b32.xlu0 %v49, 2
    %v94 = vpop.permute.xlu0 %93
    %95 = vrot.lane.b32.xlu0 %v50, 2
    %v96 = vpop.permute.xlu0 %95
    %97 = vrot.lane.b32.xlu0 %v51, 2
    %v98 = vpop.permute.xlu0 %97
    %99 = vrot.lane.b32.xlu0 %v52, 2
    %v100 = vpop.permute.xlu0 %99
    %vm117 = vcmask 146448
    %118 = vst.msk [vmem:[#allocation2 + $0x2] sm:$0xff] %vm117, %v70
    %119 = vst.msk [vmem:[#allocation2 + $0xa] sm:$0xff] %vm117, %v72
    %120 = vst.msk [vmem:[#allocation2 + $0x1a] sm:$0xff] %vm117, %v74
    %121 = vst.msk [vmem:[#allocation2 + $0x22] sm:$0xff] %vm117, %v76
    %122 = vst.msk [vmem:[#allocation2 + $0x32] sm:$0xff] %vm117, %v78
    %123 = vst.msk [vmem:[#allocation2 + $0x3a] sm:$0xff] %vm117, %v80
    %124 = vst.msk [vmem:[#allocation2 + $0x4a] sm:$0xff] %vm117, %v82
    %125 = vst.msk [vmem:[#allocation2 + $0x52] sm:$0xff] %vm117, %v84
    %126 = vst.msk [vmem:[#allocation2 + $0x62] sm:$0xff] %vm117, %v86
    %127 = vst.msk [vmem:[#allocation2 + $0x6a] sm:$0xff] %vm117, %v88
    %128 = vst.msk [vmem:[#allocation2 + $0x7a] sm:$0xff] %vm117, %v90
    %129 = vst.msk [vmem:[#allocation2 + $0x82] sm:$0xff] %vm117, %v92
    %130 = vst.msk [vmem:[#allocation2 + $0x92] sm:$0xff] %vm117, %v94
    %131 = vst.msk [vmem:[#allocation2 + $0x9a] sm:$0xff] %vm117, %v96
    %132 = vst.msk [vmem:[#allocation2 + $0xaa] sm:$0xff] %vm117, %v98
    %133 = vst.msk [vmem:[#allocation2 + $0xb2] sm:$0xff] %vm117, %v100
    %vm134 = vcmask 141330
    %135 = vst.msk [vmem:[#allocation2 - $0x2] sm:$0x4] %vm134, %v70
    %136 = vst.msk [vmem:[#allocation2 + $0x16] sm:$0x4] %vm134, %v74
    %137 = vst.msk [vmem:[#allocation2 + $0x2e] sm:$0x4] %vm134, %v78
    %138 = vst.msk [vmem:[#allocation2 + $0x46] sm:$0x4] %vm134, %v82
    %139 = vst.msk [vmem:[#allocation2 + $0x5e] sm:$0x4] %vm134, %v86
    %140 = vst.msk [vmem:[#allocation2 + $0x76] sm:$0x4] %vm134, %v90
    %141 = vst.msk [vmem:[#allocation2 + $0x8e] sm:$0x4] %vm134, %v94
    %142 = vst.msk [vmem:[#allocation2 + $0xa6] sm:$0x4] %vm134, %v98
    %vm143 = vcmask 145430
    %144 = vst.msk [vmem:[#allocation2 + $0xc] sm:$0x40] %vm143, %v72
    %145 = vst.msk [vmem:[#allocation2 + $0x24] sm:$0x40] %vm143, %v76
    %146 = vst.msk [vmem:[#allocation2 + $0x3c] sm:$0x40] %vm143, %v80
    %147 = vst.msk [vmem:[#allocation2 + $0x54] sm:$0x40] %vm143, %v84
    %148 = vst.msk [vmem:[#allocation2 + $0x6c] sm:$0x40] %vm143, %v88
    %149 = vst.msk [vmem:[#allocation2 + $0x84] sm:$0x40] %vm143, %v92
    %150 = vst.msk [vmem:[#allocation2 + $0x9c] sm:$0x40] %vm143, %v96
    %151 = vst.msk [vmem:[#allocation2 + $0xb4] sm:$0x40] %vm143, %v100
    %vm152 = vcmask 140305
    %153 = vst.msk [vmem:[#allocation2] sm:$0x2] %vm152, %v70
    %154 = vst.msk [vmem:[#allocation2 + $0x18] sm:$0x2] %vm152, %v74
    %155 = vst.msk [vmem:[#allocation2 + $0x30] sm:$0x2] %vm152, %v78
    %156 = vst.msk [vmem:[#allocation2 + $0x48] sm:$0x2] %vm152, %v82
    %157 = vst.msk [vmem:[#allocation2 + $0x60] sm:$0x2] %vm152, %v86
    %158 = vst.msk [vmem:[#allocation2 + $0x78] sm:$0x2] %vm152, %v90
    %159 = vst.msk [vmem:[#allocation2 + $0x90] sm:$0x2] %vm152, %v94
    %160 = vst.msk [vmem:[#allocation2 + $0xa8] sm:$0x2] %vm152, %v98
    %vm161 = vcmask 144405
    %162 = vst.msk [vmem:[#allocation2 + $0xe] sm:$0x20] %vm161, %v72
    %163 = vst.msk [vmem:[#allocation2 + $0x26] sm:$0x20] %vm161, %v76
    %164 = vst.msk [vmem:[#allocation2 + $0x3e] sm:$0x20] %vm161, %v80
    %165 = vst.msk [vmem:[#allocation2 + $0x56] sm:$0x20] %vm161, %v84
    %166 = vst.msk [vmem:[#allocation2 + $0x6e] sm:$0x20] %vm161, %v88
    %167 = vst.msk [vmem:[#allocation2 + $0x86] sm:$0x20] %vm161, %v92
    %168 = vst.msk [vmem:[#allocation2 + $0x9e] sm:$0x20] %vm161, %v96
    %169 = vst.msk [vmem:[#allocation2 + $0xb6] sm:$0x20] %vm161, %v100
    %v170 = vld [vmem:[#allocation2] sm:$0xff]
    %v171 = vld [vmem:[#allocation2 + $0x8] sm:$0xff]
    %v172 = vld [vmem:[#allocation2 + $0x10] sm:$0xf]
    %v173 = vld [vmem:[#allocation2 + $0x18] sm:$0xff]
    %v174 = vld [vmem:[#allocation2 + $0x20] sm:$0xff]
    %v175 = vld [vmem:[#allocation2 + $0x28] sm:$0xf]
    %v176 = vld [vmem:[#allocation2 + $0x30] sm:$0xff]
    %v177 = vld [vmem:[#allocation2 + $0x38] sm:$0xff]
    %v178 = vld [vmem:[#allocation2 + $0x40] sm:$0xf]
    %v179 = vld [vmem:[#allocation2 + $0x48] sm:$0xff]
    %v180 = vld [vmem:[#allocation2 + $0x50] sm:$0xff]
    %v181 = vld [vmem:[#allocation2 + $0x58] sm:$0xf]
    %v182 = vld [vmem:[#allocation2 + $0x60] sm:$0xff]
    %v183 = vld [vmem:[#allocation2 + $0x68] sm:$0xff]
    %v184 = vld [vmem:[#allocation2 + $0x70] sm:$0xf]
    %v185 = vld [vmem:[#allocation2 + $0x78] sm:$0xff]
    %v186 = vld [vmem:[#allocation2 + $0x80] sm:$0xff]
    %v187 = vld [vmem:[#allocation2 + $0x88] sm:$0xf]
    %v188 = vld [vmem:[#allocation2 + $0x90] sm:$0xff]
    %v189 = vld [vmem:[#allocation2 + $0x98] sm:$0xff]
    %v190 = vld [vmem:[#allocation2 + $0xa0] sm:$0xf]
    %v191 = vld [vmem:[#allocation2 + $0xa8] sm:$0xff]
    %v192 = vld [vmem:[#allocation2 + $0xb0] sm:$0xff]
    %v193 = vld [vmem:[#allocation2 + $0xb8] sm:$0xf]
    %218 = vrot.lane.b32.xlu0 %v170, 124
    %v219 = vpop.permute.xlu0 %218
    %220 = vrot.lane.b32.xlu0 %v171, 124
    %v221 = vpop.permute.xlu0 %220
    %222 = vrot.lane.b32.xlu0 %v172, 124
    %v223 = vpop.permute.xlu0 %222
    %224 = vrot.lane.b32.xlu0 %v173, 124
    %v225 = vpop.permute.xlu0 %224
    %226 = vrot.lane.b32.xlu0 %v174, 124
    %v227 = vpop.permute.xlu0 %226
    %228 = vrot.lane.b32.xlu0 %v175, 124
    %v229 = vpop.permute.xlu0 %228
    %230 = vrot.lane.b32.xlu0 %v176, 124
    %v231 = vpop.permute.xlu0 %230
    %232 = vrot.lane.b32.xlu0 %v177, 124
    %v233 = vpop.permute.xlu0 %232
    %234 = vrot.lane.b32.xlu0 %v178, 124
    %v235 = vpop.permute.xlu0 %234
    %236 = vrot.lane.b32.xlu0 %v179, 124
    %v237 = vpop.permute.xlu0 %236
    %238 = vrot.lane.b32.xlu0 %v180, 124
    %v239 = vpop.permute.xlu0 %238
    %240 = vrot.lane.b32.xlu0 %v181, 124
    %v241 = vpop.permute.xlu0 %240
    %242 = vrot.lane.b32.xlu0 %v182, 124
    %v243 = vpop.permute.xlu0 %242
    %244 = vrot.lane.b32.xlu0 %v183, 124
    %v245 = vpop.permute.xlu0 %244
    %246 = vrot.lane.b32.xlu0 %v184, 124
    %v247 = vpop.permute.xlu0 %246
    %248 = vrot.lane.b32.xlu0 %v185, 124
    %v249 = vpop.permute.xlu0 %248
    %250 = vrot.lane.b32.xlu0 %v186, 124
    %v251 = vpop.permute.xlu0 %250
    %252 = vrot.lane.b32.xlu0 %v187, 124
    %v253 = vpop.permute.xlu0 %252
    %254 = vrot.lane.b32.xlu0 %v188, 124
    %v255 = vpop.permute.xlu0 %254
    %256 = vrot.lane.b32.xlu0 %v189, 124
    %v257 = vpop.permute.xlu0 %256
    %258 = vrot.lane.b32.xlu0 %v190, 124
    %v259 = vpop.permute.xlu0 %258
    %260 = vrot.lane.b32.xlu0 %v191, 124
    %v261 = vpop.permute.xlu0 %260
    %262 = vrot.lane.b32.xlu0 %v192, 124
    %v263 = vpop.permute.xlu0 %262
    %264 = vrot.lane.b32.xlu0 %v193, 124
    %v265 = vpop.permute.xlu0 %264
    %vm290 = vcmask 7168
    %291 = vst.msk [vmem:[#allocation2] sm:$0xff] %vm290, %v219
    %292 = vst.msk [vmem:[#allocation2 + $0x8] sm:$0xff] %vm290, %v221
    %vm293 = vcmask 3072
    %294 = vst.msk [vmem:[#allocation2 + $0x10] sm:$0xf] %vm293, %v223
    %295 = vst.msk [vmem:[#allocation2 + $0x18] sm:$0xff] %vm290, %v225
    %296 = vst.msk [vmem:[#allocation2 + $0x20] sm:$0xff] %vm290, %v227
    %297 = vst.msk [vmem:[#allocation2 + $0x28] sm:$0xf] %vm293, %v229
    %298 = vst.msk [vmem:[#allocation2 + $0x30] sm:$0xff] %vm290, %v231
    %299 = vst.msk [vmem:[#allocation2 + $0x38] sm:$0xff] %vm290, %v233
    %300 = vst.msk [vmem:[#allocation2 + $0x40] sm:$0xf] %vm293, %v235
    %301 = vst.msk [vmem:[#allocation2 + $0x48] sm:$0xff] %vm290, %v237
    %302 = vst.msk [vmem:[#allocation2 + $0x50] sm:$0xff] %vm290, %v239
    %303 = vst.msk [vmem:[#allocation2 + $0x58] sm:$0xf] %vm293, %v241
    %304 = vst.msk [vmem:[#allocation2 + $0x60] sm:$0xff] %vm290, %v243
    %305 = vst.msk [vmem:[#allocation2 + $0x68] sm:$0xff] %vm290, %v245
    %306 = vst.msk [vmem:[#allocation2 + $0x70] sm:$0xf] %vm293, %v247
    %307 = vst.msk [vmem:[#allocation2 + $0x78] sm:$0xff] %vm290, %v249
    %308 = vst.msk [vmem:[#allocation2 + $0x80] sm:$0xff] %vm290, %v251
    %309 = vst.msk [vmem:[#allocation2 + $0x88] sm:$0xf] %vm293, %v253
    %310 = vst.msk [vmem:[#allocation2 + $0x90] sm:$0xff] %vm290, %v255
    %311 = vst.msk [vmem:[#allocation2 + $0x98] sm:$0xff] %vm290, %v257
    %312 = vst.msk [vmem:[#allocation2 + $0xa0] sm:$0xf] %vm293, %v259
    %313 = vst.msk [vmem:[#allocation2 + $0xa8] sm:$0xff] %vm290, %v261
    %314 = vst.msk [vmem:[#allocation2 + $0xb0] sm:$0xff] %vm290, %v263
    %315 = vst.msk [vmem:[#allocation2 + $0xb8] sm:$0xf] %vm293, %v265
    %v316 = vld [vmem:[#allocation2] sm:$0xff]
    %v317 = vld [vmem:[#allocation2 + $0x8] sm:$0xff]
    %v318 = vld [vmem:[#allocation2 + $0x10] sm:$0xf]
    %v319 = vld [vmem:[#allocation2 + $0x18] sm:$0xff]
    %v320 = vld [vmem:[#allocation2 + $0x20] sm:$0xff]
    %v321 = vld [vmem:[#allocation2 + $0x28] sm:$0xf]
    %v322 = vld [vmem:[#allocation2 + $0x30] sm:$0xff]
    %v323 = vld [vmem:[#allocation2 + $0x38] sm:$0xff]
    %v324 = vld [vmem:[#allocation2 + $0x40] sm:$0xf]
    %v325 = vld [vmem:[#allocation2 + $0x48] sm:$0xff]
    %v326 = vld [vmem:[#allocation2 + $0x50] sm:$0xff]
    %v327 = vld [vmem:[#allocation2 + $0x58] sm:$0xf]
    %v328 = vld [vmem:[#allocation2 + $0x60] sm:$0xff]
    %v329 = vld [vmem:[#allocation2 + $0x68] sm:$0xff]
    %v330 = vld [vmem:[#allocation2 + $0x70] sm:$0xf]
    %v331 = vld [vmem:[#allocation2 + $0x78] sm:$0xff]
    %v332 = vld [vmem:[#allocation2 + $0x80] sm:$0xff]
    %v333 = vld [vmem:[#allocation2 + $0x88] sm:$0xf]
    %v334 = vld [vmem:[#allocation2 + $0x90] sm:$0xff]
    %v335 = vld [vmem:[#allocation2 + $0x98] sm:$0xff]
    %v336 = vld [vmem:[#allocation2 + $0xa0] sm:$0xf]
    %v337 = vld [vmem:[#allocation2 + $0xa8] sm:$0xff]
    %v338 = vld [vmem:[#allocation2 + $0xb0] sm:$0xff]
    %v339 = vld [vmem:[#allocation2 + $0xb8] sm:$0xf]
    %364 = vrot.lane.b32.xlu0 %v316, 2
    %v365 = vpop.permute.xlu0 %364
    %366 = vrot.lane.b32.xlu0 %v317, 2
    %v367 = vpop.permute.xlu0 %366
    %368 = vrot.lane.b32.xlu0 %v318, 2
    %v369 = vpop.permute.xlu0 %368
    %370 = vrot.lane.b32.xlu0 %v319, 2
    %v371 = vpop.permute.xlu0 %370
    %372 = vrot.lane.b32.xlu0 %v320, 2
    %v373 = vpop.permute.xlu0 %372
    %374 = vrot.lane.b32.xlu0 %v321, 2
    %v375 = vpop.permute.xlu0 %374
    %376 = vrot.lane.b32.xlu0 %v322, 2
    %v377 = vpop.permute.xlu0 %376
    %378 = vrot.lane.b32.xlu0 %v323, 2
    %v379 = vpop.permute.xlu0 %378
    %380 = vrot.lane.b32.xlu0 %v324, 2
    %v381 = vpop.permute.xlu0 %380
    %382 = vrot.lane.b32.xlu0 %v325, 2
    %v383 = vpop.permute.xlu0 %382
    %384 = vrot.lane.b32.xlu0 %v326, 2
    %v385 = vpop.permute.xlu0 %384
    %386 = vrot.lane.b32.xlu0 %v327, 2
    %v387 = vpop.permute.xlu0 %386
    %388 = vrot.lane.b32.xlu0 %v328, 2
    %v389 = vpop.permute.xlu0 %388
    %390 = vrot.lane.b32.xlu0 %v329, 2
    %v391 = vpop.permute.xlu0 %390
    %392 = vrot.lane.b32.xlu0 %v330, 2
    %v393 = vpop.permute.xlu0 %392
    %394 = vrot.lane.b32.xlu0 %v331, 2
    %v395 = vpop.permute.xlu0 %394
    %396 = vrot.lane.b32.xlu0 %v332, 2
    %v397 = vpop.permute.xlu0 %396
    %398 = vrot.lane.b32.xlu0 %v333, 2
    %v399 = vpop.permute.xlu0 %398
    %400 = vrot.lane.b32.xlu0 %v334, 2
    %v401 = vpop.permute.xlu0 %400
    %402 = vrot.lane.b32.xlu0 %v335, 2
    %v403 = vpop.permute.xlu0 %402
    %404 = vrot.lane.b32.xlu0 %v336, 2
    %v405 = vpop.permute.xlu0 %404
    %406 = vrot.lane.b32.xlu0 %v337, 2
    %v407 = vpop.permute.xlu0 %406
    %408 = vrot.lane.b32.xlu0 %v338, 2
    %v409 = vpop.permute.xlu0 %408
    %410 = vrot.lane.b32.xlu0 %v339, 2
    %v411 = vpop.permute.xlu0 %410
    %vm436 = vcmask 154768
    %437 = vst.msk [vmem:[#allocation2] sm:$0xff] %vm436, %v365
    %438 = vst.msk [vmem:[#allocation2 + $0x8] sm:$0xff] %vm436, %v367
    %vm439 = vcmask 150672
    %440 = vst.msk [vmem:[#allocation2 + $0x10] sm:$0xf] %vm439, %v369
    %441 = vst.msk [vmem:[#allocation2 + $0x18] sm:$0xff] %vm436, %v371
    %442 = vst.msk [vmem:[#allocation2 + $0x20] sm:$0xff] %vm436, %v373
    %443 = vst.msk [vmem:[#allocation2 + $0x28] sm:$0xf] %vm439, %v375
    %444 = vst.msk [vmem:[#allocation2 + $0x30] sm:$0xff] %vm436, %v377
    %445 = vst.msk [vmem:[#allocation2 + $0x38] sm:$0xff] %vm436, %v379
    %446 = vst.msk [vmem:[#allocation2 + $0x40] sm:$0xf] %vm439, %v381
    %447 = vst.msk [vmem:[#allocation2 + $0x48] sm:$0xff] %vm436, %v383
    %448 = vst.msk [vmem:[#allocation2 + $0x50] sm:$0xff] %vm436, %v385
    %449 = vst.msk [vmem:[#allocation2 + $0x58] sm:$0xf] %vm439, %v387
    %450 = vst.msk [vmem:[#allocation2 + $0x60] sm:$0xff] %vm436, %v389
    %451 = vst.msk [vmem:[#allocation2 + $0x68] sm:$0xff] %vm436, %v391
    %452 = vst.msk [vmem:[#allocation2 + $0x70] sm:$0xf] %vm439, %v393
    %453 = vst.msk [vmem:[#allocation2 + $0x78] sm:$0xff] %vm436, %v395
    %454 = vst.msk [vmem:[#allocation2 + $0x80] sm:$0xff] %vm436, %v397
    %455 = vst.msk [vmem:[#allocation2 + $0x88] sm:$0xf] %vm439, %v399
    %456 = vst.msk [vmem:[#allocation2 + $0x90] sm:$0xff] %vm436, %v401
    %457 = vst.msk [vmem:[#allocation2 + $0x98] sm:$0xff] %vm436, %v403
    %458 = vst.msk [vmem:[#allocation2 + $0xa0] sm:$0xf] %vm439, %v405
    %459 = vst.msk [vmem:[#allocation2 + $0xa8] sm:$0xff] %vm436, %v407
    %460 = vst.msk [vmem:[#allocation2 + $0xb0] sm:$0xff] %vm436, %v409
    %461 = vst.msk [vmem:[#allocation2 + $0xb8] sm:$0xf] %vm439, %v411
    %v462 = vld [vmem:[#allocation2] sm:$0xff]
    %v463 = vld [vmem:[#allocation2 + $0x8] sm:$0xff]
    %v464 = vld [vmem:[#allocation2 + $0x10] sm:$0xf]
    %v465 = vld [vmem:[#allocation2 + $0x18] sm:$0xff]
    %v466 = vld [vmem:[#allocation2 + $0x20] sm:$0xff]
    %v467 = vld [vmem:[#allocation2 + $0x28] sm:$0xf]
    %v468 = vld [vmem:[#allocation2 + $0x30] sm:$0xff]
    %v469 = vld [vmem:[#allocation2 + $0x38] sm:$0xff]
    %v470 = vld [vmem:[#allocation2 + $0x40] sm:$0xf]
    %v471 = vld [vmem:[#allocation2 + $0x48] sm:$0xff]
    %v472 = vld [vmem:[#allocation2 + $0x50] sm:$0xff]
    %v473 = vld [vmem:[#allocation2 + $0x58] sm:$0xf]
    %v474 = vld [vmem:[#allocation2 + $0x60] sm:$0xff]
    %v475 = vld [vmem:[#allocation2 + $0x68] sm:$0xff]
    %v476 = vld [vmem:[#allocation2 + $0x70] sm:$0xf]
    %v477 = vld [vmem:[#allocation2 + $0x78] sm:$0xff]
    %v478 = vld [vmem:[#allocation2 + $0x80] sm:$0xff]
    %v479 = vld [vmem:[#allocation2 + $0x88] sm:$0xf]
    %v480 = vld [vmem:[#allocation2 + $0x90] sm:$0xff]
    %v481 = vld [vmem:[#allocation2 + $0x98] sm:$0xff]
    %v482 = vld [vmem:[#allocation2 + $0xa0] sm:$0xf]
    %v483 = vld [vmem:[#allocation2 + $0xa8] sm:$0xff]
    %v484 = vld [vmem:[#allocation2 + $0xb0] sm:$0xff]
    %v485 = vld [vmem:[#allocation2 + $0xb8] sm:$0xf]
    %510 = vrot.lane.b32.xlu0 %v462, 126
    %v511 = vpop.permute.xlu0 %510
    %512 = vrot.lane.b32.xlu0 %v463, 126
    %v513 = vpop.permute.xlu0 %512
    %514 = vrot.lane.b32.xlu0 %v464, 126
    %v515 = vpop.permute.xlu0 %514
    %516 = vrot.lane.b32.xlu0 %v465, 126
    %v517 = vpop.permute.xlu0 %516
    %518 = vrot.lane.b32.xlu0 %v466, 126
    %v519 = vpop.permute.xlu0 %518
    %520 = vrot.lane.b32.xlu0 %v467, 126
    %v521 = vpop.permute.xlu0 %520
    %522 = vrot.lane.b32.xlu0 %v468, 126
    %v523 = vpop.permute.xlu0 %522
    %524 = vrot.lane.b32.xlu0 %v469, 126
    %v525 = vpop.permute.xlu0 %524
    %526 = vrot.lane.b32.xlu0 %v470, 126
    %v527 = vpop.permute.xlu0 %526
    %528 = vrot.lane.b32.xlu0 %v471, 126
    %v529 = vpop.permute.xlu0 %528
    %530 = vrot.lane.b32.xlu0 %v472, 126
    %v531 = vpop.permute.xlu0 %530
    %532 = vrot.lane.b32.xlu0 %v473, 126
    %v533 = vpop.permute.xlu0 %532
    %534 = vrot.lane.b32.xlu0 %v474, 126
    %v535 = vpop.permute.xlu0 %534
    %536 = vrot.lane.b32.xlu0 %v475, 126
    %v537 = vpop.permute.xlu0 %536
    %538 = vrot.lane.b32.xlu0 %v476, 126
    %v539 = vpop.permute.xlu0 %538
    %540 = vrot.lane.b32.xlu0 %v477, 126
    %v541 = vpop.permute.xlu0 %540
    %542 = vrot.lane.b32.xlu0 %v478, 126
    %v543 = vpop.permute.xlu0 %542
    %544 = vrot.lane.b32.xlu0 %v479, 126
    %v545 = vpop.permute.xlu0 %544
    %546 = vrot.lane.b32.xlu0 %v480, 126
    %v547 = vpop.permute.xlu0 %546
    %548 = vrot.lane.b32.xlu0 %v481, 126
    %v549 = vpop.permute.xlu0 %548
    %550 = vrot.lane.b32.xlu0 %v482, 126
    %v551 = vpop.permute.xlu0 %550
    %552 = vrot.lane.b32.xlu0 %v483, 126
    %v553 = vpop.permute.xlu0 %552
    %554 = vrot.lane.b32.xlu0 %v484, 126
    %v555 = vpop.permute.xlu0 %554
    %556 = vrot.lane.b32.xlu0 %v485, 126
    %v557 = vpop.permute.xlu0 %556
    %vm582 = vcmask 15368
    %583 = vst.msk [vmem:[#allocation2] sm:$0xff] %vm582, %v511
    %584 = vst.msk [vmem:[#allocation2 + $0x8] sm:$0xff] %vm582, %v513
    %vm585 = vcmask 11272
    %586 = vst.msk [vmem:[#allocation2 + $0x10] sm:$0xf] %vm585, %v515
    %587 = vst.msk [vmem:[#allocation2 + $0x18] sm:$0xff] %vm582, %v517
    %588 = vst.msk [vmem:[#allocation2 + $0x20] sm:$0xff] %vm582, %v519
    %589 = vst.msk [vmem:[#allocation2 + $0x28] sm:$0xf] %vm585, %v521
    %590 = vst.msk [vmem:[#allocation2 + $0x30] sm:$0xff] %vm582, %v523
    %591 = vst.msk [vmem:[#allocation2 + $0x38] sm:$0xff] %vm582, %v525
    %592 = vst.msk [vmem:[#allocation2 + $0x40] sm:$0xf] %vm585, %v527
    %593 = vst.msk [vmem:[#allocation2 + $0x48] sm:$0xff] %vm582, %v529
    %594 = vst.msk [vmem:[#allocation2 + $0x50] sm:$0xff] %vm582, %v531
    %595 = vst.msk [vmem:[#allocation2 + $0x58] sm:$0xf] %vm585, %v533
    %596 = vst.msk [vmem:[#allocation2 + $0x60] sm:$0xff] %vm582, %v535
    %597 = vst.msk [vmem:[#allocation2 + $0x68] sm:$0xff] %vm582, %v537
    %598 = vst.msk [vmem:[#allocation2 + $0x70] sm:$0xf] %vm585, %v539
    %599 = vst.msk [vmem:[#allocation2 + $0x78] sm:$0xff] %vm582, %v541
    %600 = vst.msk [vmem:[#allocation2 + $0x80] sm:$0xff] %vm582, %v543
    %601 = vst.msk [vmem:[#allocation2 + $0x88] sm:$0xf] %vm585, %v545
    %602 = vst.msk [vmem:[#allocation2 + $0x90] sm:$0xff] %vm582, %v547
    %603 = vst.msk [vmem:[#allocation2 + $0x98] sm:$0xff] %vm582, %v549
    %604 = vst.msk [vmem:[#allocation2 + $0xa0] sm:$0xf] %vm585, %v551
    %605 = vst.msk [vmem:[#allocation2 + $0xa8] sm:$0xff] %vm582, %v553
    %606 = vst.msk [vmem:[#allocation2 + $0xb0] sm:$0xff] %vm582, %v555
    %607 = vst.msk [vmem:[#allocation2 + $0xb8] sm:$0xf] %vm585, %v557
    %v608 = vld [vmem:[#allocation2] sm:$0xff]
    %v609 = vld [vmem:[#allocation2 + $0x8] sm:$0xff]
    %v610 = vld [vmem:[#allocation2 + $0x10] sm:$0xf]
    %v611 = vld [vmem:[#allocation2 + $0x18] sm:$0xff]
    %v612 = vld [vmem:[#allocation2 + $0x20] sm:$0xff]
    %v613 = vld [vmem:[#allocation2 + $0x28] sm:$0xf]
    %v614 = vld [vmem:[#allocation2 + $0x30] sm:$0xff]
    %v615 = vld [vmem:[#allocation2 + $0x38] sm:$0xff]
    %v616 = vld [vmem:[#allocation2 + $0x40] sm:$0xf]
    %v617 = vld [vmem:[#allocation2 + $0x48] sm:$0xff]
    %v618 = vld [vmem:[#allocation2 + $0x50] sm:$0xff]
    %v619 = vld [vmem:[#allocation2 + $0x58] sm:$0xf]
    %v620 = vld [vmem:[#allocation2 + $0x60] sm:$0xff]
    %v621 = vld [vmem:[#allocation2 + $0x68] sm:$0xff]
    %v622 = vld [vmem:[#allocation2 + $0x70] sm:$0xf]
    %v623 = vld [vmem:[#allocation2 + $0x78] sm:$0xff]
    %v624 = vld [vmem:[#allocation2 + $0x80] sm:$0xff]
    %v625 = vld [vmem:[#allocation2 + $0x88] sm:$0xf]
    %v626 = vld [vmem:[#allocation2 + $0x90] sm:$0xff]
    %v627 = vld [vmem:[#allocation2 + $0x98] sm:$0xff]
    %v628 = vld [vmem:[#allocation2 + $0xa0] sm:$0xf]
    %v629 = vld [vmem:[#allocation2 + $0xa8] sm:$0xff]
    %v630 = vld [vmem:[#allocation2 + $0xb0] sm:$0xff]
    %v631 = vld [vmem:[#allocation2 + $0xb8] sm:$0xf]
    %656 = vrot.lane.b32.xlu0 %v608, 4
    %v657 = vpop.permute.xlu0 %656
    %658 = vrot.lane.b32.xlu0 %v609, 4
    %v659 = vpop.permute.xlu0 %658
    %660 = vrot.lane.b32.xlu0 %v610, 4
    %v661 = vpop.permute.xlu0 %660
    %662 = vrot.lane.b32.xlu0 %v611, 4
    %v663 = vpop.permute.xlu0 %662
    %664 = vrot.lane.b32.xlu0 %v612, 4
    %v665 = vpop.permute.xlu0 %664
    %666 = vrot.lane.b32.xlu0 %v613, 4
    %v667 = vpop.permute.xlu0 %666
    %668 = vrot.lane.b32.xlu0 %v614, 4
    %v669 = vpop.permute.xlu0 %668
    %670 = vrot.lane.b32.xlu0 %v615, 4
    %v671 = vpop.permute.xlu0 %670
    %672 = vrot.lane.b32.xlu0 %v616, 4
    %v673 = vpop.permute.xlu0 %672
    %674 = vrot.lane.b32.xlu0 %v617, 4
    %v675 = vpop.permute.xlu0 %674
    %676 = vrot.lane.b32.xlu0 %v618, 4
    %v677 = vpop.permute.xlu0 %676
    %678 = vrot.lane.b32.xlu0 %v619, 4
    %v679 = vpop.permute.xlu0 %678
    %680 = vrot.lane.b32.xlu0 %v620, 4
    %v681 = vpop.permute.xlu0 %680
    %682 = vrot.lane.b32.xlu0 %v621, 4
    %v683 = vpop.permute.xlu0 %682
    %684 = vrot.lane.b32.xlu0 %v622, 4
    %v685 = vpop.permute.xlu0 %684
    %686 = vrot.lane.b32.xlu0 %v623, 4
    %v687 = vpop.permute.xlu0 %686
    %688 = vrot.lane.b32.xlu0 %v624, 4
    %v689 = vpop.permute.xlu0 %688
    %690 = vrot.lane.b32.xlu0 %v625, 4
    %v691 = vpop.permute.xlu0 %690
    %692 = vrot.lane.b32.xlu0 %v626, 4
    %v693 = vpop.permute.xlu0 %692
    %694 = vrot.lane.b32.xlu0 %v627, 4
    %v695 = vpop.permute.xlu0 %694
    %696 = vrot.lane.b32.xlu0 %v628, 4
    %v697 = vpop.permute.xlu0 %696
    %698 = vrot.lane.b32.xlu0 %v629, 4
    %v699 = vpop.permute.xlu0 %698
    %700 = vrot.lane.b32.xlu0 %v630, 4
    %v701 = vpop.permute.xlu0 %700
    %702 = vrot.lane.b32.xlu0 %v631, 4
    %v703 = vpop.permute.xlu0 %702
    %vm728 = vcmask 162968
    %729 = vst.msk [vmem:[#allocation2] sm:$0xff] %vm728, %v657
    %730 = vst.msk [vmem:[#allocation2 + $0x8] sm:$0xff] %vm728, %v659
    %vm731 = vcmask 158872
    %732 = vst.msk [vmem:[#allocation2 + $0x10] sm:$0xf] %vm731, %v661
    %733 = vst.msk [vmem:[#allocation2 + $0x18] sm:$0xff] %vm728, %v663
    %734 = vst.msk [vmem:[#allocation2 + $0x20] sm:$0xff] %vm728, %v665
    %735 = vst.msk [vmem:[#allocation2 + $0x28] sm:$0xf] %vm731, %v667
    %736 = vst.msk [vmem:[#allocation2 + $0x30] sm:$0xff] %vm728, %v669
    %737 = vst.msk [vmem:[#allocation2 + $0x38] sm:$0xff] %vm728, %v671
    %738 = vst.msk [vmem:[#allocation2 + $0x40] sm:$0xf] %vm731, %v673
    %739 = vst.msk [vmem:[#allocation2 + $0x48] sm:$0xff] %vm728, %v675
    %740 = vst.msk [vmem:[#allocation2 + $0x50] sm:$0xff] %vm728, %v677
    %741 = vst.msk [vmem:[#allocation2 + $0x58] sm:$0xf] %vm731, %v679
    %742 = vst.msk [vmem:[#allocation2 + $0x60] sm:$0xff] %vm728, %v681
    %743 = vst.msk [vmem:[#allocation2 + $0x68] sm:$0xff] %vm728, %v683
    %744 = vst.msk [vmem:[#allocation2 + $0x70] sm:$0xf] %vm731, %v685
    %745 = vst.msk [vmem:[#allocation2 + $0x78] sm:$0xff] %vm728, %v687
    %746 = vst.msk [vmem:[#allocation2 + $0x80] sm:$0xff] %vm728, %v689
    %747 = vst.msk [vmem:[#allocation2 + $0x88] sm:$0xf] %vm731, %v691
    %748 = vst.msk [vmem:[#allocation2 + $0x90] sm:$0xff] %vm728, %v693
    %749 = vst.msk [vmem:[#allocation2 + $0x98] sm:$0xff] %vm728, %v695
    %750 = vst.msk [vmem:[#allocation2 + $0xa0] sm:$0xf] %vm731, %v697
    %751 = vst.msk [vmem:[#allocation2 + $0xa8] sm:$0xff] %vm728, %v699
    %752 = vst.msk [vmem:[#allocation2 + $0xb0] sm:$0xff] %vm728, %v701
    %753 = vst.msk [vmem:[#allocation2 + $0xb8] sm:$0xf] %vm731, %v703
    %s754 = sld [smem:[#allocation3]]
    %v755 = vld [vmem:[#allocation2] sm:$0xff]
    %v756 = vld [vmem:[#allocation2 + $0x8] sm:$0xff]
    %v757 = vld [vmem:[#allocation2 + $0x18] sm:$0xff]
    %v758 = vld [vmem:[#allocation2 + $0x20] sm:$0xff]
    %v759 = vld [vmem:[#allocation2 + $0x30] sm:$0xff]
    %v760 = vld [vmem:[#allocation2 + $0x38] sm:$0xff]
    %v761 = vld [vmem:[#allocation2 + $0x48] sm:$0xff]
    %v762 = vld [vmem:[#allocation2 + $0x50] sm:$0xff]
    %v763 = vld [vmem:[#allocation2 + $0x60] sm:$0xff]
    %v764 = vld [vmem:[#allocation2 + $0x68] sm:$0xff]
    %v765 = vld [vmem:[#allocation2 + $0x78] sm:$0xff]
    %v766 = vld [vmem:[#allocation2 + $0x80] sm:$0xff]
    %v767 = vld [vmem:[#allocation2 + $0x90] sm:$0xff]
    %v768 = vld [vmem:[#allocation2 + $0x98] sm:$0xff]
    %v769 = vld [vmem:[#allocation2 + $0xa8] sm:$0xff]
    %v770 = vld [vmem:[#allocation2 + $0xb0] sm:$0xff]
    %v771 = vstv %s754
    %v772 = vmul.f32 %v771, %v755
    %v773 = vmul.f32 %v771, %v756
    %v774 = vmul.f32 %v771, %v757
    %v775 = vmul.f32 %v771, %v758
    %v776 = vmul.f32 %v771, %v759
    %v777 = vmul.f32 %v771, %v760
    %v778 = vmul.f32 %v771, %v761
    %v779 = vmul.f32 %v771, %v762
    %v780 = vmul.f32 %v771, %v763
    %v781 = vmul.f32 %v771, %v764
    %v782 = vmul.f32 %v771, %v765
    %v783 = vmul.f32 %v771, %v766
    %v784 = vmul.f32 %v771, %v767
    %v785 = vmul.f32 %v771, %v768
    %v786 = vmul.f32 %v771, %v769
    %v787 = vmul.f32 %v771, %v770
    %s788 = sld [smem:[#allocation3 + $0x1]]
    %v789 = vld [vmem:[#allocation2 + $0x1] sm:$0xff]
    %v790 = vld [vmem:[#allocation2 + $0x9] sm:$0xff]
    %v791 = vld [vmem:[#allocation2 + $0x19] sm:$0xff]
    %v792 = vld [vmem:[#allocation2 + $0x21] sm:$0xff]
    %v793 = vld [vmem:[#allocation2 + $0x31] sm:$0xff]
    %v794 = vld [vmem:[#allocation2 + $0x39] sm:$0xff]
    %v795 = vld [vmem:[#allocation2 + $0x49] sm:$0xff]
    %v796 = vld [vmem:[#allocation2 + $0x51] sm:$0xff]
    %v797 = vld [vmem:[#allocation2 + $0x61] sm:$0xff]
    %v798 = vld [vmem:[#allocation2 + $0x69] sm:$0xff]
    %v799 = vld [vmem:[#allocation2 + $0x79] sm:$0xff]
    %v800 = vld [vmem:[#allocation2 + $0x81] sm:$0xff]
    %v801 = vld [vmem:[#allocation2 + $0x91] sm:$0xff]
    %v802 = vld [vmem:[#allocation2 + $0x99] sm:$0xff]
    %v803 = vld [vmem:[#allocation2 + $0xa9] sm:$0xff]
    %v804 = vld [vmem:[#allocation2 + $0xb1] sm:$0xff]
    %v805 = vstv %s788
    %v806 = vmul.f32 %v805, %v789
    %v807 = vmul.f32 %v805, %v790
    %v808 = vmul.f32 %v805, %v791
    %v809 = vmul.f32 %v805, %v792
    %v810 = vmul.f32 %v805, %v793
    %v811 = vmul.f32 %v805, %v794
    %v812 = vmul.f32 %v805, %v795
    %v813 = vmul.f32 %v805, %v796
    %v814 = vmul.f32 %v805, %v797
    %v815 = vmul.f32 %v805, %v798
    %v816 = vmul.f32 %v805, %v799
    %v817 = vmul.f32 %v805, %v800
    %v818 = vmul.f32 %v805, %v801
    %v819 = vmul.f32 %v805, %v802
    %v820 = vmul.f32 %v805, %v803
    %v821 = vmul.f32 %v805, %v804
    %v822 = vadd.f32 %v772, %v806
    %v823 = vadd.f32 %v773, %v807
    %v824 = vadd.f32 %v774, %v808
    %v825 = vadd.f32 %v775, %v809
    %v826 = vadd.f32 %v776, %v810
    %v827 = vadd.f32 %v777, %v811
    %v828 = vadd.f32 %v778, %v812
    %v829 = vadd.f32 %v779, %v813
    %v830 = vadd.f32 %v780, %v814
    %v831 = vadd.f32 %v781, %v815
    %v832 = vadd.f32 %v782, %v816
    %v833 = vadd.f32 %v783, %v817
    %v834 = vadd.f32 %v784, %v818
    %v835 = vadd.f32 %v785, %v819
    %v836 = vadd.f32 %v786, %v820
    %v837 = vadd.f32 %v787, %v821
    %s838 = sld [smem:[#allocation3 + $0x2]]
    %v839 = vld [vmem:[#allocation2 + $0x2] sm:$0xff]
    %v840 = vld [vmem:[#allocation2 + $0xa] sm:$0xff]
    %v841 = vld [vmem:[#allocation2 + $0x1a] sm:$0xff]
    %v842 = vld [vmem:[#allocation2 + $0x22] sm:$0xff]
    %v843 = vld [vmem:[#allocation2 + $0x32] sm:$0xff]
    %v844 = vld [vmem:[#allocation2 + $0x3a] sm:$0xff]
    %v845 = vld [vmem:[#allocation2 + $0x4a] sm:$0xff]
    %v846 = vld [vmem:[#allocation2 + $0x52] sm:$0xff]
    %v847 = vld [vmem:[#allocation2 + $0x62] sm:$0xff]
    %v848 = vld [vmem:[#allocation2 + $0x6a] sm:$0xff]
    %v849 = vld [vmem:[#allocation2 + $0x7a] sm:$0xff]
    %v850 = vld [vmem:[#allocation2 + $0x82] sm:$0xff]
    %v851 = vld [vmem:[#allocation2 + $0x92] sm:$0xff]
    %v852 = vld [vmem:[#allocation2 + $0x9a] sm:$0xff]
    %v853 = vld [vmem:[#allocation2 + $0xaa] sm:$0xff]
    %v854 = vld [vmem:[#allocation2 + $0xb2] sm:$0xff]
    %v855 = vstv %s838
    %v856 = vmul.f32 %v855, %v839
    %v857 = vmul.f32 %v855, %v840
    %v858 = vmul.f32 %v855, %v841
    %v859 = vmul.f32 %v855, %v842
    %v860 = vmul.f32 %v855, %v843
    %v861 = vmul.f32 %v855, %v844
    %v862 = vmul.f32 %v855, %v845
    %v863 = vmul.f32 %v855, %v846
    %v864 = vmul.f32 %v855, %v847
    %v865 = vmul.f32 %v855, %v848
    %v866 = vmul.f32 %v855, %v849
    %v867 = vmul.f32 %v855, %v850
    %v868 = vmul.f32 %v855, %v851
    %v869 = vmul.f32 %v855, %v852
    %v870 = vmul.f32 %v855, %v853
    %v871 = vmul.f32 %v855, %v854
    %v872 = vadd.f32 %v822, %v856
    %v873 = vadd.f32 %v823, %v857
    %v874 = vadd.f32 %v824, %v858
    %v875 = vadd.f32 %v825, %v859
    %v876 = vadd.f32 %v826, %v860
    %v877 = vadd.f32 %v827, %v861
    %v878 = vadd.f32 %v828, %v862
    %v879 = vadd.f32 %v829, %v863
    %v880 = vadd.f32 %v830, %v864
    %v881 = vadd.f32 %v831, %v865
    %v882 = vadd.f32 %v832, %v866
    %v883 = vadd.f32 %v833, %v867
    %v884 = vadd.f32 %v834, %v868
    %v885 = vadd.f32 %v835, %v869
    %v886 = vadd.f32 %v836, %v870
    %v887 = vadd.f32 %v837, %v871
    %s888 = sld [smem:[#allocation3 + $0x3]]
    %v889 = vld [vmem:[#allocation2 + $0x3] sm:$0xff]
    %v890 = vld [vmem:[#allocation2 + $0xb] sm:$0xff]
    %v891 = vld [vmem:[#allocation2 + $0x1b] sm:$0xff]
    %v892 = vld [vmem:[#allocation2 + $0x23] sm:$0xff]
    %v893 = vld [vmem:[#allocation2 + $0x33] sm:$0xff]
    %v894 = vld [vmem:[#allocation2 + $0x3b] sm:$0xff]
    %v895 = vld [vmem:[#allocation2 + $0x4b] sm:$0xff]
    %v896 = vld [vmem:[#allocation2 + $0x53] sm:$0xff]
    %v897 = vld [vmem:[#allocation2 + $0x63] sm:$0xff]
    %v898 = vld [vmem:[#allocation2 + $0x6b] sm:$0xff]
    %v899 = vld [vmem:[#allocation2 + $0x7b] sm:$0xff]
    %v900 = vld [vmem:[#allocation2 + $0x83] sm:$0xff]
    %v901 = vld [vmem:[#allocation2 + $0x93] sm:$0xff]
    %v902 = vld [vmem:[#allocation2 + $0x9b] sm:$0xff]
    %v903 = vld [vmem:[#allocation2 + $0xab] sm:$0xff]
    %v904 = vld [vmem:[#allocation2 + $0xb3] sm:$0xff]
    %v905 = vstv %s888
    %v906 = vmul.f32 %v905, %v889
    %v907 = vmul.f32 %v905, %v890
    %v908 = vmul.f32 %v905, %v891
    %v909 = vmul.f32 %v905, %v892
    %v910 = vmul.f32 %v905, %v893
    %v911 = vmul.f32 %v905, %v894
    %v912 = vmul.f32 %v905, %v895
    %v913 = vmul.f32 %v905, %v896
    %v914 = vmul.f32 %v905, %v897
    %v915 = vmul.f32 %v905, %v898
    %v916 = vmul.f32 %v905, %v899
    %v917 = vmul.f32 %v905, %v900
    %v918 = vmul.f32 %v905, %v901
    %v919 = vmul.f32 %v905, %v902
    %v920 = vmul.f32 %v905, %v903
    %v921 = vmul.f32 %v905, %v904
    %v922 = vadd.f32 %v872, %v906
    %v923 = vadd.f32 %v873, %v907
    %v924 = vadd.f32 %v874, %v908
    %v925 = vadd.f32 %v875, %v909
    %v926 = vadd.f32 %v876, %v910
    %v927 = vadd.f32 %v877, %v911
    %v928 = vadd.f32 %v878, %v912
    %v929 = vadd.f32 %v879, %v913
    %v930 = vadd.f32 %v880, %v914
    %v931 = vadd.f32 %v881, %v915
    %v932 = vadd.f32 %v882, %v916
    %v933 = vadd.f32 %v883, %v917
    %v934 = vadd.f32 %v884, %v918
    %v935 = vadd.f32 %v885, %v919
    %v936 = vadd.f32 %v886, %v920
    %v937 = vadd.f32 %v887, %v921
    %s938 = sld [smem:[#allocation3 + $0x4]]
    %v939 = vld [vmem:[#allocation2 + $0x4] sm:$0xff]
    %v940 = vld [vmem:[#allocation2 + $0xc] sm:$0xff]
    %v941 = vld [vmem:[#allocation2 + $0x1c] sm:$0xff]
    %v942 = vld [vmem:[#allocation2 + $0x24] sm:$0xff]
    %v943 = vld [vmem:[#allocation2 + $0x34] sm:$0xff]
    %v944 = vld [vmem:[#allocation2 + $0x3c] sm:$0xff]
    %v945 = vld [vmem:[#allocation2 + $0x4c] sm:$0xff]
    %v946 = vld [vmem:[#allocation2 + $0x54] sm:$0xff]
    %v947 = vld [vmem:[#allocation2 + $0x64] sm:$0xff]
    %v948 = vld [vmem:[#allocation2 + $0x6c] sm:$0xff]
    %v949 = vld [vmem:[#allocation2 + $0x7c] sm:$0xff]
    %v950 = vld [vmem:[#allocation2 + $0x84] sm:$0xff]
    %v951 = vld [vmem:[#allocation2 + $0x94] sm:$0xff]
    %v952 = vld [vmem:[#allocation2 + $0x9c] sm:$0xff]
    %v953 = vld [vmem:[#allocation2 + $0xac] sm:$0xff]
    %v954 = vld [vmem:[#allocation2 + $0xb4] sm:$0xff]
    %v955 = vstv %s938
    %v956 = vmul.f32 %v955, %v939
    %v957 = vmul.f32 %v955, %v940
    %v958 = vmul.f32 %v955, %v941
    %v959 = vmul.f32 %v955, %v942
    %v960 = vmul.f32 %v955, %v943
    %v961 = vmul.f32 %v955, %v944
    %v962 = vmul.f32 %v955, %v945
    %v963 = vmul.f32 %v955, %v946
    %v964 = vmul.f32 %v955, %v947
    %v965 = vmul.f32 %v955, %v948
    %v966 = vmul.f32 %v955, %v949
    %v967 = vmul.f32 %v955, %v950
    %v968 = vmul.f32 %v955, %v951
    %v969 = vmul.f32 %v955, %v952
    %v970 = vmul.f32 %v955, %v953
    %v971 = vmul.f32 %v955, %v954
    %v972 = vadd.f32 %v922, %v956
    %v973 = vadd.f32 %v923, %v957
    %v974 = vadd.f32 %v924, %v958
    %v975 = vadd.f32 %v925, %v959
    %v976 = vadd.f32 %v926, %v960
    %v977 = vadd.f32 %v927, %v961
    %v978 = vadd.f32 %v928, %v962
    %v979 = vadd.f32 %v929, %v963
    %v980 = vadd.f32 %v930, %v964
    %v981 = vadd.f32 %v931, %v965
    %v982 = vadd.f32 %v932, %v966
    %v983 = vadd.f32 %v933, %v967
    %v984 = vadd.f32 %v934, %v968
    %v985 = vadd.f32 %v935, %v969
    %v986 = vadd.f32 %v936, %v970
    %v987 = vadd.f32 %v937, %v971
    %v988 = vmul.f32 %v771, %v972
    %v989 = vmul.f32 %v771, %v973
    %v990 = vmul.f32 %v771, %v974
    %v991 = vmul.f32 %v771, %v975
    %v992 = vmul.f32 %v771, %v976
    %v993 = vmul.f32 %v771, %v977
    %v994 = vmul.f32 %v771, %v978
    %v995 = vmul.f32 %v771, %v979
    %v996 = vmul.f32 %v771, %v980
    %v997 = vmul.f32 %v771, %v981
    %v998 = vmul.f32 %v771, %v982
    %v999 = vmul.f32 %v771, %v983
    %v1000 = vmul.f32 %v771, %v984
    %v1001 = vmul.f32 %v771, %v985
    %v1002 = vmul.f32 %v771, %v986
    %v1003 = vmul.f32 %v771, %v987
    %v1004 = vmul.f32 %v805, %v972
    %v1005 = vmul.f32 %v805, %v973
    %v1006 = vmul.f32 %v805, %v974
    %v1007 = vmul.f32 %v805, %v975
    %v1008 = vmul.f32 %v805, %v976
    %v1009 = vmul.f32 %v805, %v977
    %v1010 = vmul.f32 %v805, %v978
    %v1011 = vmul.f32 %v805, %v979
    %v1012 = vmul.f32 %v805, %v980
    %v1013 = vmul.f32 %v805, %v981
    %v1014 = vmul.f32 %v805, %v982
    %v1015 = vmul.f32 %v805, %v983
    %v1016 = vmul.f32 %v805, %v984
    %v1017 = vmul.f32 %v805, %v985
    %v1018 = vmul.f32 %v805, %v986
    %v1019 = vmul.f32 %v805, %v987
    %1036 = vrot.lane.b32.xlu0 %v1004, 127
    %v1037 = vpop.permute.xlu0 %1036
    %1038 = vrot.lane.b32.xlu0 %v1005, 127
    %v1039 = vpop.permute.xlu0 %1038
    %1040 = vrot.lane.b32.xlu0 %v1006, 127
    %v1041 = vpop.permute.xlu0 %1040
    %1042 = vrot.lane.b32.xlu0 %v1007, 127
    %v1043 = vpop.permute.xlu0 %1042
    %1044 = vrot.lane.b32.xlu0 %v1008, 127
    %v1045 = vpop.permute.xlu0 %1044
    %1046 = vrot.lane.b32.xlu0 %v1009, 127
    %v1047 = vpop.permute.xlu0 %1046
    %1048 = vrot.lane.b32.xlu0 %v1010, 127
    %v1049 = vpop.permute.xlu0 %1048
    %1050 = vrot.lane.b32.xlu0 %v1011, 127
    %v1051 = vpop.permute.xlu0 %1050
    %1052 = vrot.lane.b32.xlu0 %v1012, 127
    %v1053 = vpop.permute.xlu0 %1052
    %1054 = vrot.lane.b32.xlu0 %v1013, 127
    %v1055 = vpop.permute.xlu0 %1054
    %1056 = vrot.lane.b32.xlu0 %v1014, 127
    %v1057 = vpop.permute.xlu0 %1056
    %1058 = vrot.lane.b32.xlu0 %v1015, 127
    %v1059 = vpop.permute.xlu0 %1058
    %1060 = vrot.lane.b32.xlu0 %v1016, 127
    %v1061 = vpop.permute.xlu0 %1060
    %1062 = vrot.lane.b32.xlu0 %v1017, 127
    %v1063 = vpop.permute.xlu0 %1062
    %1064 = vrot.lane.b32.xlu0 %v1018, 127
    %v1065 = vpop.permute.xlu0 %1064
    %1066 = vrot.lane.b32.xlu0 %v1019, 127
    %v1067 = vpop.permute.xlu0 %1066
    %v1084 = vadd.f32 %v988, %v1037
    %v1085 = vadd.f32 %v989, %v1039
    %v1086 = vadd.f32 %v990, %v1041
    %v1087 = vadd.f32 %v991, %v1043
    %v1088 = vadd.f32 %v992, %v1045
    %v1089 = vadd.f32 %v993, %v1047
    %v1090 = vadd.f32 %v994, %v1049
    %v1091 = vadd.f32 %v995, %v1051
    %v1092 = vadd.f32 %v996, %v1053
    %v1093 = vadd.f32 %v997, %v1055
    %v1094 = vadd.f32 %v998, %v1057
    %v1095 = vadd.f32 %v999, %v1059
    %v1096 = vadd.f32 %v1000, %v1061
    %v1097 = vadd.f32 %v1001, %v1063
    %v1098 = vadd.f32 %v1002, %v1065
    %v1099 = vadd.f32 %v1003, %v1067
    %v1100 = vmul.f32 %v855, %v972
    %v1101 = vmul.f32 %v855, %v973
    %v1102 = vmul.f32 %v855, %v974
    %v1103 = vmul.f32 %v855, %v975
    %v1104 = vmul.f32 %v855, %v976
    %v1105 = vmul.f32 %v855, %v977
    %v1106 = vmul.f32 %v855, %v978
    %v1107 = vmul.f32 %v855, %v979
    %v1108 = vmul.f32 %v855, %v980
    %v1109 = vmul.f32 %v855, %v981
    %v1110 = vmul.f32 %v855, %v982
    %v1111 = vmul.f32 %v855, %v983
    %v1112 = vmul.f32 %v855, %v984
    %v1113 = vmul.f32 %v855, %v985
    %v1114 = vmul.f32 %v855, %v986
    %v1115 = vmul.f32 %v855, %v987
    %1132 = vrot.lane.b32.xlu0 %v1100, 126
    %v1133 = vpop.permute.xlu0 %1132
    %1134 = vrot.lane.b32.xlu0 %v1101, 126
    %v1135 = vpop.permute.xlu0 %1134
    %1136 = vrot.lane.b32.xlu0 %v1102, 126
    %v1137 = vpop.permute.xlu0 %1136
    %1138 = vrot.lane.b32.xlu0 %v1103, 126
    %v1139 = vpop.permute.xlu0 %1138
    %1140 = vrot.lane.b32.xlu0 %v1104, 126
    %v1141 = vpop.permute.xlu0 %1140
    %1142 = vrot.lane.b32.xlu0 %v1105, 126
    %v1143 = vpop.permute.xlu0 %1142
    %1144 = vrot.lane.b32.xlu0 %v1106, 126
    %v1145 = vpop.permute.xlu0 %1144
    %1146 = vrot.lane.b32.xlu0 %v1107, 126
    %v1147 = vpop.permute.xlu0 %1146
    %1148 = vrot.lane.b32.xlu0 %v1108, 126
    %v1149 = vpop.permute.xlu0 %1148
    %1150 = vrot.lane.b32.xlu0 %v1109, 126
    %v1151 = vpop.permute.xlu0 %1150
    %1152 = vrot.lane.b32.xlu0 %v1110, 126
    %v1153 = vpop.permute.xlu0 %1152
    %1154 = vrot.lane.b32.xlu0 %v1111, 126
    %v1155 = vpop.permute.xlu0 %1154
    %1156 = vrot.lane.b32.xlu0 %v1112, 126
    %v1157 = vpop.permute.xlu0 %1156
    %1158 = vrot.lane.b32.xlu0 %v1113, 126
    %v1159 = vpop.permute.xlu0 %1158
    %1160 = vrot.lane.b32.xlu0 %v1114, 126
    %v1161 = vpop.permute.xlu0 %1160
    %1162 = vrot.lane.b32.xlu0 %v1115, 126
    %v1163 = vpop.permute.xlu0 %1162
    %v1180 = vadd.f32 %v1084, %v1133
    %v1181 = vadd.f32 %v1085, %v1135
    %v1182 = vadd.f32 %v1086, %v1137
    %v1183 = vadd.f32 %v1087, %v1139
    %v1184 = vadd.f32 %v1088, %v1141
    %v1185 = vadd.f32 %v1089, %v1143
    %v1186 = vadd.f32 %v1090, %v1145
    %v1187 = vadd.f32 %v1091, %v1147
    %v1188 = vadd.f32 %v1092, %v1149
    %v1189 = vadd.f32 %v1093, %v1151
    %v1190 = vadd.f32 %v1094, %v1153
    %v1191 = vadd.f32 %v1095, %v1155
    %v1192 = vadd.f32 %v1096, %v1157
    %v1193 = vadd.f32 %v1097, %v1159
    %v1194 = vadd.f32 %v1098, %v1161
    %v1195 = vadd.f32 %v1099, %v1163
    %v1196 = vmul.f32 %v905, %v972
    %v1197 = vmul.f32 %v905, %v973
    %v1198 = vmul.f32 %v905, %v974
    %v1199 = vmul.f32 %v905, %v975
    %v1200 = vmul.f32 %v905, %v976
    %v1201 = vmul.f32 %v905, %v977
    %v1202 = vmul.f32 %v905, %v978
    %v1203 = vmul.f32 %v905, %v979
    %v1204 = vmul.f32 %v905, %v980
    %v1205 = vmul.f32 %v905, %v981
    %v1206 = vmul.f32 %v905, %v982
    %v1207 = vmul.f32 %v905, %v983
    %v1208 = vmul.f32 %v905, %v984
    %v1209 = vmul.f32 %v905, %v985
    %v1210 = vmul.f32 %v905, %v986
    %v1211 = vmul.f32 %v905, %v987
    %1228 = vrot.lane.b32.xlu0 %v1196, 125
    %v1229 = vpop.permute.xlu0 %1228
    %1230 = vrot.lane.b32.xlu0 %v1197, 125
    %v1231 = vpop.permute.xlu0 %1230
    %1232 = vrot.lane.b32.xlu0 %v1198, 125
    %v1233 = vpop.permute.xlu0 %1232
    %1234 = vrot.lane.b32.xlu0 %v1199, 125
    %v1235 = vpop.permute.xlu0 %1234
    %1236 = vrot.lane.b32.xlu0 %v1200, 125
    %v1237 = vpop.permute.xlu0 %1236
    %1238 = vrot.lane.b32.xlu0 %v1201, 125
    %v1239 = vpop.permute.xlu0 %1238
    %1240 = vrot.lane.b32.xlu0 %v1202, 125
    %v1241 = vpop.permute.xlu0 %1240
    %1242 = vrot.lane.b32.xlu0 %v1203, 125
    %v1243 = vpop.permute.xlu0 %1242
    %1244 = vrot.lane.b32.xlu0 %v1204, 125
    %v1245 = vpop.permute.xlu0 %1244
    %1246 = vrot.lane.b32.xlu0 %v1205, 125
    %v1247 = vpop.permute.xlu0 %1246
    %1248 = vrot.lane.b32.xlu0 %v1206, 125
    %v1249 = vpop.permute.xlu0 %1248
    %1250 = vrot.lane.b32.xlu0 %v1207, 125
    %v1251 = vpop.permute.xlu0 %1250
    %1252 = vrot.lane.b32.xlu0 %v1208, 125
    %v1253 = vpop.permute.xlu0 %1252
    %1254 = vrot.lane.b32.xlu0 %v1209, 125
    %v1255 = vpop.permute.xlu0 %1254
    %1256 = vrot.lane.b32.xlu0 %v1210, 125
    %v1257 = vpop.permute.xlu0 %1256
    %1258 = vrot.lane.b32.xlu0 %v1211, 125
    %v1259 = vpop.permute.xlu0 %1258
    %v1276 = vadd.f32 %v1180, %v1229
    %v1277 = vadd.f32 %v1181, %v1231
    %v1278 = vadd.f32 %v1182, %v1233
    %v1279 = vadd.f32 %v1183, %v1235
    %v1280 = vadd.f32 %v1184, %v1237
    %v1281 = vadd.f32 %v1185, %v1239
    %v1282 = vadd.f32 %v1186, %v1241
    %v1283 = vadd.f32 %v1187, %v1243
    %v1284 = vadd.f32 %v1188, %v1245
    %v1285 = vadd.f32 %v1189, %v1247
    %v1286 = vadd.f32 %v1190, %v1249
    %v1287 = vadd.f32 %v1191, %v1251
    %v1288 = vadd.f32 %v1192, %v1253
    %v1289 = vadd.f32 %v1193, %v1255
    %v1290 = vadd.f32 %v1194, %v1257
    %v1291 = vadd.f32 %v1195, %v1259
    %v1292 = vmul.f32 %v955, %v972
    %v1293 = vmul.f32 %v955, %v973
    %v1294 = vmul.f32 %v955, %v974
    %v1295 = vmul.f32 %v955, %v975
    %v1296 = vmul.f32 %v955, %v976
    %v1297 = vmul.f32 %v955, %v977
    %v1298 = vmul.f32 %v955, %v978
    %v1299 = vmul.f32 %v955, %v979
    %v1300 = vmul.f32 %v955, %v980
    %v1301 = vmul.f32 %v955, %v981
    %v1302 = vmul.f32 %v955, %v982
    %v1303 = vmul.f32 %v955, %v983
    %v1304 = vmul.f32 %v955, %v984
    %v1305 = vmul.f32 %v955, %v985
    %v1306 = vmul.f32 %v955, %v986
    %v1307 = vmul.f32 %v955, %v987
    %1324 = vrot.lane.b32.xlu0 %v1292, 124
    %v1325 = vpop.permute.xlu0 %1324
    %1326 = vrot.lane.b32.xlu0 %v1293, 124
    %v1327 = vpop.permute.xlu0 %1326
    %1328 = vrot.lane.b32.xlu0 %v1294, 124
    %v1329 = vpop.permute.xlu0 %1328
    %1330 = vrot.lane.b32.xlu0 %v1295, 124
    %v1331 = vpop.permute.xlu0 %1330
    %1332 = vrot.lane.b32.xlu0 %v1296, 124
    %v1333 = vpop.permute.xlu0 %1332
    %1334 = vrot.lane.b32.xlu0 %v1297, 124
    %v1335 = vpop.permute.xlu0 %1334
    %1336 = vrot.lane.b32.xlu0 %v1298, 124
    %v1337 = vpop.permute.xlu0 %1336
    %1338 = vrot.lane.b32.xlu0 %v1299, 124
    %v1339 = vpop.permute.xlu0 %1338
    %1340 = vrot.lane.b32.xlu0 %v1300, 124
    %v1341 = vpop.permute.xlu0 %1340
    %1342 = vrot.lane.b32.xlu0 %v1301, 124
    %v1343 = vpop.permute.xlu0 %1342
    %1344 = vrot.lane.b32.xlu0 %v1302, 124
    %v1345 = vpop.permute.xlu0 %1344
    %1346 = vrot.lane.b32.xlu0 %v1303, 124
    %v1347 = vpop.permute.xlu0 %1346
    %1348 = vrot.lane.b32.xlu0 %v1304, 124
    %v1349 = vpop.permute.xlu0 %1348
    %1350 = vrot.lane.b32.xlu0 %v1305, 124
    %v1351 = vpop.permute.xlu0 %1350
    %1352 = vrot.lane.b32.xlu0 %v1306, 124
    %v1353 = vpop.permute.xlu0 %1352
    %1354 = vrot.lane.b32.xlu0 %v1307, 124
    %v1355 = vpop.permute.xlu0 %1354
    %v1372 = vadd.f32 %v1276, %v1325
    %v1373 = vadd.f32 %v1277, %v1327
    %v1374 = vadd.f32 %v1278, %v1329
    %v1375 = vadd.f32 %v1279, %v1331
    %v1376 = vadd.f32 %v1280, %v1333
    %v1377 = vadd.f32 %v1281, %v1335
    %v1378 = vadd.f32 %v1282, %v1337
    %v1379 = vadd.f32 %v1283, %v1339
    %v1380 = vadd.f32 %v1284, %v1341
    %v1381 = vadd.f32 %v1285, %v1343
    %v1382 = vadd.f32 %v1286, %v1345
    %v1383 = vadd.f32 %v1287, %v1347
    %v1384 = vadd.f32 %v1288, %v1349
    %v1385 = vadd.f32 %v1289, %v1351
    %v1386 = vadd.f32 %v1290, %v1353
    %v1387 = vadd.f32 %v1291, %v1355
    %v1388 = vsub.f32 %v1372, %v37
    %v1389 = vsub.f32 %v1373, %v38
    %v1390 = vsub.f32 %v1374, %v39
    %v1391 = vsub.f32 %v1375, %v40
    %v1392 = vsub.f32 %v1376, %v41
    %v1393 = vsub.f32 %v1377, %v42
    %v1394 = vsub.f32 %v1378, %v43
    %v1395 = vsub.f32 %v1379, %v44
    %v1396 = vsub.f32 %v1380, %v45
    %v1397 = vsub.f32 %v1381, %v46
    %v1398 = vsub.f32 %v1382, %v47
    %v1399 = vsub.f32 %v1383, %v48
    %v1400 = vsub.f32 %v1384, %v49
    %v1401 = vsub.f32 %v1385, %v50
    %v1402 = vsub.f32 %v1386, %v51
    %v1403 = vsub.f32 %v1387, %v52
    %vm1404 = vcmask 130048
    %1405 = vst.msk [vmem:[#allocation8] sm:$0xff] %vm1404, %v1388
    %1406 = vst.msk [vmem:[#allocation8 + $0x8] sm:$0xff] %vm1404, %v1389
    %1407 = vst.msk [vmem:[#allocation8 + $0x10] sm:$0xff] %vm1404, %v1390
    %1408 = vst.msk [vmem:[#allocation8 + $0x18] sm:$0xff] %vm1404, %v1391
    %1409 = vst.msk [vmem:[#allocation8 + $0x20] sm:$0xff] %vm1404, %v1392
    %1410 = vst.msk [vmem:[#allocation8 + $0x28] sm:$0xff] %vm1404, %v1393
    %1411 = vst.msk [vmem:[#allocation8 + $0x30] sm:$0xff] %vm1404, %v1394
    %1412 = vst.msk [vmem:[#allocation8 + $0x38] sm:$0xff] %vm1404, %v1395
    %1413 = vst.msk [vmem:[#allocation8 + $0x40] sm:$0xff] %vm1404, %v1396
    %1414 = vst.msk [vmem:[#allocation8 + $0x48] sm:$0xff] %vm1404, %v1397
    %1415 = vst.msk [vmem:[#allocation8 + $0x50] sm:$0xff] %vm1404, %v1398
    %1416 = vst.msk [vmem:[#allocation8 + $0x58] sm:$0xff] %vm1404, %v1399
    %1417 = vst.msk [vmem:[#allocation8 + $0x60] sm:$0xff] %vm1404, %v1400
    %1418 = vst.msk [vmem:[#allocation8 + $0x68] sm:$0xff] %vm1404, %v1401
    %1419 = vst.msk [vmem:[#allocation8 + $0x70] sm:$0xff] %vm1404, %v1402
    %1420 = vst.msk [vmem:[#allocation8 + $0x78] sm:$0xff] %vm1404, %v1403
    // Predicated region
    $region18: #{tpu_custom_call.1} parent=1 // pred_check
      _
    $region19: #{tpu_custom_call.1} parent=1 // pred_check_branch
      %1422 = sbr.rel (0) target = $region21
    $region20: #{tpu_custom_call.1} parent=1 // pred_region
      %s1424 = ssub.s32 2048, 2048
      %1425 = vsyncadd [#allocation5], %s1424
      %s1426 = sshll.u32 [#allocation8], 4
      %s1427 = int_to_ptr.vmem [resolvable:$true] %s1426
      %1432 = dma.vmem_to_hbm [thread:$0]  %s1427, 2048, %s2, [#allocation5], 128, 128, 8
    $region21: #{tpu_custom_call.1} parent=1 // pred_fallthru
      _
    // Predicated region
    $region22: #{tpu_custom_call.1} parent=1 // pred_check
      _
    $region23: #{tpu_custom_call.1} parent=1 // pred_check_branch
      %1434 = sbr.rel (0) target = $region25
    $region24: #{tpu_custom_call.1} parent=1 // pred_region
      %1435 = dma.done [#allocation5], 2048
    $region25: #{tpu_custom_call.1} parent=1 // pred_fallthru
      _
    %1436 = vsyncpa [#allocation4], 1
    %1437 = vsyncpa [#allocation5], 1
    %1438 = vsyncpa [#allocation6], 1

</llo_original>
